<compile_context>
chip_gen: v7x
topology: tpu7x:2x2x1
jax: 0.10.0
libtpu: 0.0.40
codegen_flags: <defaults>
</compile_context>

<pallas_src>
import jax
import jax.numpy as jnp
from jax import lax
from jax.experimental import pallas as pl
from jax.experimental.pallas import tpu as pltpu


_DEFAULT_TILE = 256   # multiple of 256 fills the MXU M dim on v6e/v7x (128-wide on v5e)


def explain_drug_kernel(q_ref, asp_ref, w1b_ref, w2b_ref, w_ref, o_ref):
    """Fused MLP -> (unnormalized) softmax -> aspect mix -> -cosine(patient_asp, q).

    q_ref:   (TM, 2e)    packed query rows [diag | pro]
    asp_ref: (1,  A)     aspect weights
    w1b_ref: (2e+1, 3e)  [W1 ; b1]   bf16   (W1 stored as (in, out))
    w2b_ref: (3e+1, A)   [W2 ; b2]   bf16
    w_ref:   (A, 2e)     aspect embedding W, bf16
    o_ref:   (TM, 1)     scores
    """
    e2 = q_ref.shape[-1]           # 2*e
    h3 = w2b_ref.shape[0] - 1      # 3*e

    q = q_ref[...].astype(jnp.float32)                                    # (TM, 2e)

    # --- Linear(2e -> 3e) + ReLU.  bf16 weights (halved DMA), f32 accumulate. ---
    w1 = w1b_ref[pl.ds(0, e2), :].astype(jnp.float32)
    b1 = w1b_ref[pl.ds(e2, 1), :].astype(jnp.float32)
    h = jnp.maximum(jnp.dot(q, w1, preferred_element_type=jnp.float32) + b1, 0.0)

    # --- Linear(3e -> A).  The softmax normalization is a per-row positive scale
    # on patient_asp which cancels exactly in the cosine similarity, so only the
    # numerically-stabilizing max subtraction is kept (no sum / reciprocal). ---
    w2 = w2b_ref[pl.ds(0, h3), :].astype(jnp.float32)
    b2 = w2b_ref[pl.ds(h3, 1), :].astype(jnp.float32)
    logits = jnp.dot(h, w2, preferred_element_type=jnp.float32) + b2      # (TM, A)
    factor = jnp.exp(logits - jnp.max(logits, axis=-1, keepdims=True))    # unnormalized

    # --- patient_asp (up to the cancelled scale) = (factor * asp) @ W ---
    weighted = factor * asp_ref[...].astype(jnp.float32)                  # (TM, A)
    pa = jnp.dot(weighted, w_ref[...].astype(jnp.float32),
                 preferred_element_type=jnp.float32)                      # (TM, 2e)

    # --- sim = -cosine_similarity(patient_asp, q), eps = 1e-8 (PyTorch default).
    # The eps clamp only differs from the module for degenerate (near-zero) rows. ---
    dot = jnp.sum(pa * q, axis=-1, keepdims=True)
    npa2 = jnp.sum(pa * pa, axis=-1, keepdims=True)
    nq2 = jnp.sum(q * q, axis=-1, keepdims=True)
    inv_denom = lax.rsqrt(jnp.maximum(npa2 * nq2, 1e-16))                 # rsqrt -> EUP
    o_ref[...] = -(dot * inv_denom)


def _run_pallas(q, asp2d, packed, *, tm):
    """q: (M, 2e) with M a multiple of tm.  Weights stay resident across the M grid."""
    w1b, w2b, w = packed
    mp, e2 = q.shape
    const = lambda i: (0, 0)
    return pl.pallas_call(
        explain_drug_kernel,
        out_shape=jax.ShapeDtypeStruct((mp, 1), jnp.float32),
        grid=(mp // tm,),
        in_specs=[
            pl.BlockSpec((tm, e2), lambda i: (i, 0)),   # pipelined row tiles of q
            pl.BlockSpec(asp2d.shape, const),           # resident across the grid
            pl.BlockSpec(w1b.shape, const),
            pl.BlockSpec(w2b.shape, const),
            pl.BlockSpec(w.shape, const),
        ],
        out_specs=pl.BlockSpec((tm, 1), lambda i: (i, 0)),
        compiler_params=pltpu.CompilerParams(
            dimension_semantics=("parallel",)),          # shards rows over v7x's 2 TCs
    )(q, asp2d, w1b, w2b, w)


def _tile_and_pad(m):
    """Pick an M tile: small batches -> one full-array block, else 256-row tiles."""
    if m <= _DEFAULT_TILE:
        return m, m
    tm = _DEFAULT_TILE
    return tm, ((m + tm - 1) // tm) * tm


@jax.jit
def explain_drug_forward(x, y, asp, packed):
    """Module-faithful forward: scores the LAST patient row, returns shape (1,)."""
    if x.ndim == 1:
        x = x[None, :]
    if y.ndim == 1:
        y = y[None, :]
    # cat([x, y], -1)[-1:] at the XLA/HBM level: only one row ever reaches the kernel.
    q = jnp.concatenate([x[-1:], y[-1:]], axis=-1).astype(jnp.float32)    # (1, 2e)
    asp2d = asp.reshape(1, -1).astype(jnp.float32)
    sim = _run_pallas(q, asp2d, packed, tm=1)
    return sim.reshape(1)


@jax.jit
def explain_drug_score_rows(x_rows, y_rows, asp, packed):
    """Batched throughput path: scores every (x, y) row pair through the M grid."""
    m = x_rows.shape[0]
    q = jnp.concatenate([x_rows, y_rows], axis=-1).astype(jnp.float32)    # (m, 2e)
    asp2d = asp.reshape(1, -1).astype(jnp.float32)
    tm, mp = _tile_and_pad(m)
    if mp != m:
        q = jnp.pad(q, ((0, mp - m), (0, 0)))   # zero rows are harmless (no NaNs)
    sims = _run_pallas(q, asp2d, packed, tm=tm)
    return sims[:m, 0]


def prepare_params(W, W1, b1, W2, b2, dtype=jnp.bfloat16):
    """One-time packing/casting (never on the per-call hot path).

    W  : (A, 2e)   aspect embedding
    W1 : (2e, 3e)  Linear1 stored as (in, out)     b1 : (3e,)
    W2 : (3e, A)   Linear2 stored as (in, out)     b2 : (A,)
    Stored bf16 (f32 accumulation in-kernel); biases folded as an extra sublane row.
    """
    w1b = jnp.concatenate([W1, b1[None, :]], axis=0).astype(dtype)        # (2e+1, 3e)
    w2b = jnp.concatenate([W2, b2[None, :]], axis=0).astype(dtype)        # (3e+1, A)
    w = W.astype(dtype)                                                   # (A, 2e)
    return (w1b, w2b, w)


def make_params(key, num_asp, e_dim):
    """Deterministic synthetic parameters (shapes from the module __init__)."""
    k = jax.random.split(key, 5)
    W = jax.random.normal(k[0], (num_asp, 2 * e_dim), jnp.float32)        # Aspect_emb.W
    W1 = jax.random.normal(k[1], (2 * e_dim, 3 * e_dim), jnp.float32) * 0.05
    b1 = jax.random.normal(k[2], (3 * e_dim,), jnp.float32) * 0.05
    W2 = jax.random.normal(k[3], (3 * e_dim, num_asp), jnp.float32) * 0.05
    b2 = jax.random.normal(k[4], (num_asp,), jnp.float32) * 0.05
    return (W, W1, b1, W2, b2)


if __name__ == "__main__":
    # Small shapes consistent with the module: e_dim=32 -> 2e=64, 3e=96; num_asp=256.
    num_asp, e_dim, batch = 256, 32, 2

    key = jax.random.PRNGKey(0)
    kx, ky, ka, kp = jax.random.split(key, 4)
    x = jax.random.normal(kx, (batch, e_dim), jnp.float32)    # diag_latent
    y = jax.random.normal(ky, (batch, e_dim), jnp.float32)    # pro_latent
    asp = jax.random.uniform(ka, (num_asp,), jnp.float32)     # aspect weights

    W, W1, b1, W2, b2 = make_params(kp, num_asp, e_dim)
    packed = prepare_params(W, W1, b1, W2, b2)

    # Pure-JAX reference using the same stored (bf16-rounded) parameters, with the
    # full softmax math (kernel omits the normalization; it cancels in the cosine).
    w1b_f, w2b_f, w_f = [p.astype(jnp.float32) for p in packed]
    W1_f, b1_f = w1b_f[:-1], w1b_f[-1]
    W2_f, b2_f = w2b_f[:-1], w2b_f[-1]

    def ref_sims(q):
        h = jnp.maximum(q @ W1_f + b1_f, 0.0)
        factor = jax.nn.softmax(h @ W2_f + b2_f, axis=-1)
        pa = (factor * asp[None, :]) @ w_f
        denom = jnp.maximum(
            jnp.linalg.norm(pa, axis=-1) * jnp.linalg.norm(q, axis=-1), 1e-8)
        return -(jnp.sum(pa * q, axis=-1) / denom)

    # --- module-faithful path (last row only) ---
    sim = explain_drug_forward(x, y, asp, packed)
    jax.block_until_ready(sim)
    ref = ref_sims(jnp.concatenate([x, y], axis=-1)[-1:, :])
    assert sim.shape == (1,), sim.shape
    assert jnp.allclose(sim, ref, atol=1e-3, rtol=1e-3), (sim, ref)

    # --- batched path: many query rows through the same kernel in one call ---
    m = 16
    kb1, kb2 = jax.random.split(jax.random.PRNGKey(1))
    xs = jax.random.normal(kb1, (m, e_dim), jnp.float32)
    ys = jax.random.normal(kb2, (m, e_dim), jnp.float32)
    sims_b = explain_drug_score_rows(xs, ys, asp, packed)
    jax.block_until_ready(sims_b)
    ref_b = ref_sims(jnp.concatenate([xs, ys], axis=-1))
    assert sims_b.shape == (m,), sims_b.shape
    assert jnp.allclose(sims_b, ref_b, atol=1e-3, rtol=1e-3), (sims_b, ref_b)

    print("KERNEL_OK")
</pallas_src>

<mosaic_0001>
module attributes {stable_mosaic.version = 11 : i64} {
  func.func @explain_drug_kernel(%arg0: i32, %arg1: memref<1x64xf32, #tpu.memory_space<vmem>>, %arg2: memref<1x256xf32, #tpu.memory_space<vmem>>, %arg3: memref<65x96xbf16, #tpu.memory_space<vmem>>, %arg4: memref<97x256xbf16, #tpu.memory_space<vmem>>, %arg5: memref<256x64xbf16, #tpu.memory_space<vmem>>, %arg6: memref<1x1xf32, #tpu.memory_space<vmem>>) attributes {dimension_semantics = [#tpu.dimension_semantics<parallel>], iteration_bounds = array<i64: 1>, scalar_prefetch = 0 : i64, scratch_operands = 0 : i64, tpu.core_type = #tpu.core_type<tc>, window_params = [{transform_indices = @transform_0, window_bounds = array<i64: 1, 64>}, {pipeline_mode = #tpu.pipeline_mode<synchronous>, transform_indices = @transform_1, window_bounds = array<i64: 1, 256>}, {pipeline_mode = #tpu.pipeline_mode<synchronous>, transform_indices = @transform_2, window_bounds = array<i64: 65, 96>}, {pipeline_mode = #tpu.pipeline_mode<synchronous>, transform_indices = @transform_3, window_bounds = array<i64: 97, 256>}, {pipeline_mode = #tpu.pipeline_mode<synchronous>, transform_indices = @transform_4, window_bounds = array<i64: 256, 64>}, {transform_indices = @transform_5, window_bounds = array<i64: 1, 1>}]} {
    %c0 = arith.constant 0 : index
    %c0_0 = arith.constant 0 : index
    %0 = vector.load %arg1[%c0, %c0_0] : memref<1x64xf32, #tpu.memory_space<vmem>>, vector<1x64xf32>
    %c0_1 = arith.constant 0 : index
    %c0_2 = arith.constant 0 : index
    %1 = vector.load %arg3[%c0_1, %c0_2] : memref<65x96xbf16, #tpu.memory_space<vmem>>, vector<64x96xbf16>
    %2 = arith.extf %1 : vector<64x96xbf16> to vector<64x96xf32>
    %c64 = arith.constant 64 : index
    %c0_3 = arith.constant 0 : index
    %3 = vector.load %arg3[%c64, %c0_3] : memref<65x96xbf16, #tpu.memory_space<vmem>>, vector<1x96xbf16>
    %4 = arith.extf %3 : vector<1x96xbf16> to vector<1x96xf32>
    %cst = arith.constant dense<0.000000e+00> : vector<1x96xf32>
    %5 = tpu.matmul %0, %2, %cst {dimension_numbers = #tpu.dot_dimension_numbers<[1], [0], [0], [1], [0, 0, 1, 1], [], []>} : vector<1x64xf32>, vector<64x96xf32>, vector<1x96xf32> -> vector<1x96xf32>
    %6 = arith.addf %5, %4 : vector<1x96xf32>
    %cst_4 = arith.constant 0.000000e+00 : f32
    %7 = vector.broadcast %cst_4 : f32 to vector<1x96xf32>
    %8 = arith.maximumf %6, %7 : vector<1x96xf32>
    %c0_5 = arith.constant 0 : index
    %c0_6 = arith.constant 0 : index
    %9 = vector.load %arg4[%c0_5, %c0_6] : memref<97x256xbf16, #tpu.memory_space<vmem>>, vector<96x256xbf16>
    %10 = arith.extf %9 : vector<96x256xbf16> to vector<96x256xf32>
    %c96 = arith.constant 96 : index
    %c0_7 = arith.constant 0 : index
    %11 = vector.load %arg4[%c96, %c0_7] : memref<97x256xbf16, #tpu.memory_space<vmem>>, vector<1x256xbf16>
    %12 = arith.extf %11 : vector<1x256xbf16> to vector<1x256xf32>
    %cst_8 = arith.constant dense<0.000000e+00> : vector<1x256xf32>
    %13 = tpu.matmul %8, %10, %cst_8 {dimension_numbers = #tpu.dot_dimension_numbers<[1], [0], [0], [1], [0, 0, 1, 1], [], []>} : vector<1x96xf32>, vector<96x256xf32>, vector<1x256xf32> -> vector<1x256xf32>
    %14 = arith.addf %13, %12 : vector<1x256xf32>
    %cst_9 = arith.constant dense<0xFF800000> : vector<1xf32>
    %15 = vector.multi_reduction <maximumf>, %14, %cst_9 [1] : vector<1x256xf32> to vector<1xf32>
    %16 = vector.shape_cast %15 : vector<1xf32> to vector<1x1xf32>
    %17 = vector.broadcast %16 : vector<1x1xf32> to vector<1x256xf32>
    %18 = arith.subf %14, %17 : vector<1x256xf32>
    %19 = math.exp %18 : vector<1x256xf32>
    %c0_10 = arith.constant 0 : index
    %c0_11 = arith.constant 0 : index
    %20 = vector.load %arg2[%c0_10, %c0_11] : memref<1x256xf32, #tpu.memory_space<vmem>>, vector<1x256xf32>
    %21 = arith.mulf %19, %20 : vector<1x256xf32>
    %c0_12 = arith.constant 0 : index
    %c0_13 = arith.constant 0 : index
    %22 = vector.load %arg5[%c0_12, %c0_13] : memref<256x64xbf16, #tpu.memory_space<vmem>>, vector<256x64xbf16>
    %23 = arith.extf %22 : vector<256x64xbf16> to vector<256x64xf32>
    %cst_14 = arith.constant dense<0.000000e+00> : vector<1x64xf32>
    %24 = tpu.matmul %21, %23, %cst_14 {dimension_numbers = #tpu.dot_dimension_numbers<[1], [0], [0], [1], [0, 0, 1, 1], [], []>} : vector<1x256xf32>, vector<256x64xf32>, vector<1x64xf32> -> vector<1x64xf32>
    %25 = arith.mulf %24, %0 : vector<1x64xf32>
    %cst_15 = arith.constant dense<0.000000e+00> : vector<1xf32>
    %26 = vector.multi_reduction <add>, %25, %cst_15 [1] : vector<1x64xf32> to vector<1xf32>
    %27 = vector.shape_cast %26 : vector<1xf32> to vector<1x1xf32>
    %28 = arith.mulf %24, %24 : vector<1x64xf32>
    %cst_16 = arith.constant dense<0.000000e+00> : vector<1xf32>
    %29 = vector.multi_reduction <add>, %28, %cst_16 [1] : vector<1x64xf32> to vector<1xf32>
    %30 = vector.shape_cast %29 : vector<1xf32> to vector<1x1xf32>
    %31 = arith.mulf %0, %0 : vector<1x64xf32>
    %cst_17 = arith.constant dense<0.000000e+00> : vector<1xf32>
    %32 = vector.multi_reduction <add>, %31, %cst_17 [1] : vector<1x64xf32> to vector<1xf32>
    %33 = vector.shape_cast %32 : vector<1xf32> to vector<1x1xf32>
    %34 = arith.mulf %30, %33 : vector<1x1xf32>
    %cst_18 = arith.constant 1.000000e-16 : f32
    %35 = vector.broadcast %cst_18 : f32 to vector<1x1xf32>
    %36 = arith.maximumf %34, %35 : vector<1x1xf32>
    %37 = math.rsqrt %36 : vector<1x1xf32>
    %38 = arith.mulf %27, %37 : vector<1x1xf32>
    %cst_19 = arith.constant 0.000000e+00 : f32
    %39 = vector.broadcast %cst_19 : f32 to vector<1x1xf32>
    %40 = arith.subf %39, %38 : vector<1x1xf32>
    %c0_20 = arith.constant 0 : index
    %c0_21 = arith.constant 0 : index
    %41 = vector.load %arg6[%c0_20, %c0_21] : memref<1x1xf32, #tpu.memory_space<vmem>>, vector<1x1xf32>
    tpu.vector_store %arg6[%c0_20, %c0_21], %40 {strides = array<i32>} : memref<1x1xf32, #tpu.memory_space<vmem>>, vector<1x1xf32>,
    return
  }
  func.func @transform_0(%arg0: i32) -> (i32, i32) {
    %c0_i32 = arith.constant 0 : i32
    %c0_i32_0 = arith.constant 0 : i32
    return %arg0, %c0_i32 : i32, i32
  }
  func.func @transform_1(%arg0: i32) -> (i32, i32) {
    %c0_i32 = arith.constant 0 : i32
    %c0_i32_0 = arith.constant 0 : i32
    %c0_i32_1 = arith.constant 0 : i32
    return %c0_i32, %c0_i32_0 : i32, i32
  }
  func.func @transform_2(%arg0: i32) -> (i32, i32) {
    %c0_i32 = arith.constant 0 : i32
    %c0_i32_0 = arith.constant 0 : i32
    %c0_i32_1 = arith.constant 0 : i32
    return %c0_i32, %c0_i32_0 : i32, i32
  }
  func.func @transform_3(%arg0: i32) -> (i32, i32) {
    %c0_i32 = arith.constant 0 : i32
    %c0_i32_0 = arith.constant 0 : i32
    %c0_i32_1 = arith.constant 0 : i32
    return %c0_i32, %c0_i32_0 : i32, i32
  }
  func.func @transform_4(%arg0: i32) -> (i32, i32) {
    %c0_i32 = arith.constant 0 : i32
    %c0_i32_0 = arith.constant 0 : i32
    %c0_i32_1 = arith.constant 0 : i32
    return %c0_i32, %c0_i32_0 : i32, i32
  }
  func.func @transform_5(%arg0: i32) -> (i32, i32) {
    %c0_i32 = arith.constant 0 : i32
    %c0_i32_0 = arith.constant 0 : i32
    return %arg0, %c0_i32 : i32, i32
  }
}

</mosaic_0001>

<llo_original>
// kernel: explain_drug_forward.1
$region0: #{explain_drug_forward.1}
  #allocation0 [shape = 'u32[]', space=smem, size = 0x4, offset = 0x4, fixed_abs, tag = 'smem constant byte address 0x4 - core index']
  #allocation1 [shape = 'u32[144,128]{1,0:T(1,128)}', space=vmem, size = 0x12000, scoped, tag = 'internal scratch']
  %s0 = inlined_call_operand.vmem [shape: f32[1,64], index: 0, kind: input, shape index: {}]
  %s1 = inlined_call_operand.vmem [shape: f32[1,256], index: 1, kind: input, shape index: {}]
  %s2 = inlined_call_operand.vmem [shape: bf16[65,96], index: 2, kind: input, shape index: {}]
  %s3 = inlined_call_operand.vmem [shape: bf16[97,256], index: 3, kind: input, shape index: {}]
  %s4 = inlined_call_operand.vmem [shape: bf16[256,64], index: 4, kind: input, shape index: {}]
  %s5 = inlined_call_operand.hbm [shape: f32[1,1], index: 5, kind: output, shape index: {}]
  %s6 = sld [smem:[#allocation0]]
  $region30: #{explain_drug_forward.1} parent=0
    _
  %s8 = ssub.s32 1, %s6
  %s9 = scalar_select 0, %s8, %s6
  $region1: #{explain_drug_forward.1} parent=0
    #allocation2 [shape = 'u8[512]{0}', space=vmem, size = 0x400, scoped, tag = 'output window, operand 0, single buffered']
    #allocation3 [shape = 's32[1]{0}', space=sflag, size = 0x4, scoped, tag = 'scoped memory for explain_drug_forward.1']
    %10 = vsyncpa [#allocation3], 0
    // Predicated region
    $region2: #{explain_drug_forward.1} parent=1 // pred_check
      _
    $region3: #{explain_drug_forward.1} parent=1 // pred_check_branch
      %12 = sbr.rel (0) target = $region5
    $region4: #{explain_drug_forward.1} parent=1 // pred_region
      _
    $region5: #{explain_drug_forward.1} parent=1 // pred_fallthru
      _
    // Predicated region
    $region6: #{explain_drug_forward.1} parent=1 // pred_check
      _
    $region7: #{explain_drug_forward.1} parent=1 // pred_check_branch
      %14 = sbr.rel (0) target = $region9
    $region8: #{explain_drug_forward.1} parent=1 // pred_region
      _
    $region9: #{explain_drug_forward.1} parent=1 // pred_fallthru
      _
    // Predicated region
    $region10: #{explain_drug_forward.1} parent=1 // pred_check
      _
    $region11: #{explain_drug_forward.1} parent=1 // pred_check_branch
      %16 = sbr.rel (0) target = $region13
    $region12: #{explain_drug_forward.1} parent=1 // pred_region
      _
    $region13: #{explain_drug_forward.1} parent=1 // pred_fallthru
      _
    // Predicated region
    $region14: #{explain_drug_forward.1} parent=1 // pred_check
      _
    $region15: #{explain_drug_forward.1} parent=1 // pred_check_branch
      %18 = sbr.rel (0) target = $region17
    $region16: #{explain_drug_forward.1} parent=1 // pred_region
      _
    $region17: #{explain_drug_forward.1} parent=1 // pred_fallthru
      _
    // Predicated region
    $region18: #{explain_drug_forward.1} parent=1 // pred_check
      _
    $region19: #{explain_drug_forward.1} parent=1 // pred_check_branch
      %20 = sbr.rel (0) target = $region21
    $region20: #{explain_drug_forward.1} parent=1 // pred_region
      _
    $region21: #{explain_drug_forward.1} parent=1 // pred_fallthru
      _
    %v21 = vld [vmem:[%s0] sm:$0x1]
    %v22 = vld [vmem:[%s2] sm:$0xf]
    %v23 = vld [vmem:[%s2 + $0x4] sm:$0xf]
    %v24 = vld [vmem:[%s2 + $0x8] sm:$0xf]
    %v25 = vld [vmem:[%s2 + $0xc] sm:$0xf]
    %v26 = vld [vmem:[%s2 + $0x10] sm:$0xf]
    %v27 = vld [vmem:[%s2 + $0x14] sm:$0xf]
    %v28 = vld [vmem:[%s2 + $0x18] sm:$0xf]
    %v29 = vld [vmem:[%s2 + $0x1c] sm:$0xf]
    %v30 = vunpack.c.l.bf16 %v22
    %v31 = vunpack.c.l.bf16 %v23
    %v32 = vunpack.c.l.bf16 %v24
    %v33 = vunpack.c.l.bf16 %v25
    %v34 = vunpack.c.l.bf16 %v26
    %v35 = vunpack.c.l.bf16 %v27
    %v36 = vunpack.c.l.bf16 %v28
    %v37 = vunpack.c.l.bf16 %v29
    %v38 = vld [vmem:[%s2 + $0x20] sm:$0x1]
    %v39 = vunpack.c.l.bf16 %v38
    %vm40 = vcmask 523264
    %v42 = vsel %vm40, %v21, 0
    %44 = vmatprep.subr.mxu0 0.0
    %45 = vmatpush1.msra.mxu0 %v30
    %46 = vmatprep.subr.mxu0 0.0
    %47 = vmatpush1.msra.mxu0 %v31
    %48 = vmatprep.subr.mxu0 0.0
    %49 = vmatpush1.msra.mxu0 %v32
    %50 = vmatprep.subr.mxu0 0.0
    %51 = vmatpush1.msra.mxu0 %v33
    %52 = vmatprep.subr.mxu0 0.0
    %53 = vmatpush1.msra.mxu0 %v34
    %54 = vmatprep.subr.mxu0 0.0
    %55 = vmatpush1.msra.mxu0 %v35
    %56 = vmatprep.subr.mxu0 0.0
    %57 = vmatpush1.msra.mxu0 %v36
    %58 = vmatprep.subr.mxu0 0.0
    %59 = vmatpush1.msra.mxu0 %v37
    %60 = vmatprep.subr.mxu0 0.0
    %61 = vmatpush1.msra.mxu0 0.0
    %62 = vmatprep.subr.mxu0 0.0
    %63 = vmatpush1.msra.mxu0 0.0
    %64 = vmatprep.subr.mxu0 0.0
    %65 = vmatpush1.msra.mxu0 0.0
    %66 = vmatprep.subr.mxu0 0.0
    %67 = vmatpush1.msra.mxu0 0.0
    %68 = vmatprep.subr.mxu0 0.0
    %69 = vmatpush1.msra.mxu0 0.0
    %70 = vmatprep.subr.mxu0 0.0
    %71 = vmatpush1.msra.mxu0 0.0
    %72 = vmatprep.subr.mxu0 0.0
    %73 = vmatpush1.msra.mxu0 0.0
    %74 = vmatprep.subr.mxu0 0.0
    %75 = vmatpush1.msra.mxu0 0.0
    %76 = vmatprep.subr.mxu0 0.0
    %77 = vmatpush1.msra.mxu0 0.0
    %78 = vmatprep.subr.mxu0 0.0
    %79 = vmatpush1.msra.mxu0 0.0
    %80 = vmatprep.subr.mxu0 0.0
    %81 = vmatpush1.msra.mxu0 0.0
    %82 = vmatprep.subr.mxu0 0.0
    %83 = vmatpush1.msra.mxu0 0.0
    %84 = vmatprep.subr.mxu0 0.0
    %85 = vmatpush1.msra.mxu0 0.0
    %86 = vmatprep.subr.mxu0 0.0
    %87 = vmatpush1.msra.mxu0 0.0
    %88 = vmatprep.subr.mxu0 0.0
    %89 = vmatpush1.msra.mxu0 0.0
    %90 = vmatprep.subr.mxu0 0.0
    %91 = vmatpush1.msra.mxu0 0.0
    %92 = vmatprep.subr.mxu0 0.0
    %93 = vmatpush1.msra.mxu0 0.0
    %94 = vmatprep.subr.mxu0 0.0
    %95 = vmatpush1.msra.mxu0 0.0
    %96 = vmatprep.subr.mxu0 0.0
    %97 = vmatpush1.msra.mxu0 0.0
    %98 = vmatprep.subr.mxu0 0.0
    %99 = vmatpush1.msra.mxu0 0.0
    %100 = vmatprep.subr.mxu0 0.0
    %101 = vmatpush1.msra.mxu0 0.0
    %102 = vmatprep.subr.mxu0 0.0
    %103 = vmatpush1.msra.mxu0 0.0
    %104 = vmatprep.subr.mxu0 0.0
    %105 = vmatpush1.msra.mxu0 0.0
    %106 = vmatprep.subr.mxu0 0.0
    %107 = vmatpush1.msra.mxu0 0.0
    %108 = vmatprep.mubr.f32.mxu0 0.0
    %109 = vmatmul.mubr.f32.gmra.mrb[0].mxu0 %v42
    %v110 = vpop.f32.mrb[0].mxu0
    %v111 = vadd.f32 %v39, %v110
    %v112 = vpop.f32.mrb[0].mxu0
    %113 = vdwg.mxu0
    %v114 = vmax.f32 %v111, 0.0
    %v115 = vld [vmem:[%s3] sm:$0xff]
    %v116 = vld [vmem:[%s3 + $0x8] sm:$0xff]
    %v117 = vld [vmem:[%s3 + $0x10] sm:$0xff]
    %v118 = vld [vmem:[%s3 + $0x18] sm:$0xff]
    %v119 = vld [vmem:[%s3 + $0x20] sm:$0xff]
    %v120 = vld [vmem:[%s3 + $0x28] sm:$0xff]
    %v121 = vld [vmem:[%s3 + $0x30] sm:$0xff]
    %v122 = vld [vmem:[%s3 + $0x38] sm:$0xff]
    %v123 = vld [vmem:[%s3 + $0x40] sm:$0xff]
    %v124 = vld [vmem:[%s3 + $0x48] sm:$0xff]
    %v125 = vld [vmem:[%s3 + $0x50] sm:$0xff]
    %v126 = vld [vmem:[%s3 + $0x58] sm:$0xff]
    %v127 = vunpack.c.l.bf16 %v115
    %v128 = vunpack.c.h.bf16 %v115
    %v129 = vunpack.c.l.bf16 %v116
    %v130 = vunpack.c.h.bf16 %v116
    %v131 = vunpack.c.l.bf16 %v117
    %v132 = vunpack.c.h.bf16 %v117
    %v133 = vunpack.c.l.bf16 %v118
    %v134 = vunpack.c.h.bf16 %v118
    %v135 = vunpack.c.l.bf16 %v119
    %v136 = vunpack.c.h.bf16 %v119
    %v137 = vunpack.c.l.bf16 %v120
    %v138 = vunpack.c.h.bf16 %v120
    %v139 = vunpack.c.l.bf16 %v121
    %v140 = vunpack.c.h.bf16 %v121
    %v141 = vunpack.c.l.bf16 %v122
    %v142 = vunpack.c.h.bf16 %v122
    %v143 = vunpack.c.l.bf16 %v123
    %v144 = vunpack.c.h.bf16 %v123
    %v145 = vunpack.c.l.bf16 %v124
    %v146 = vunpack.c.h.bf16 %v124
    %v147 = vunpack.c.l.bf16 %v125
    %v148 = vunpack.c.h.bf16 %v125
    %v149 = vunpack.c.l.bf16 %v126
    %v150 = vunpack.c.h.bf16 %v126
    %v151 = vld [vmem:[%s3 + $0x60] sm:$0x11]
    %v152 = vunpack.c.l.bf16 %v151
    %v153 = vunpack.c.h.bf16 %v151
    %vm154 = vcmask 785408
    %v156 = vsel %vm154, %v114, 0
    %158 = vmatprep.subr.mxu0 %v128
    %159 = vmatpush1.msra.mxu0 %v127
    %160 = vmatprep.subr.mxu0 %v130
    %161 = vmatpush1.msra.mxu0 %v129
    %162 = vmatprep.subr.mxu0 %v132
    %163 = vmatpush1.msra.mxu0 %v131
    %164 = vmatprep.subr.mxu0 %v134
    %165 = vmatpush1.msra.mxu0 %v133
    %166 = vmatprep.subr.mxu0 %v136
    %167 = vmatpush1.msra.mxu0 %v135
    %168 = vmatprep.subr.mxu0 %v138
    %169 = vmatpush1.msra.mxu0 %v137
    %170 = vmatprep.subr.mxu0 %v140
    %171 = vmatpush1.msra.mxu0 %v139
    %172 = vmatprep.subr.mxu0 %v142
    %173 = vmatpush1.msra.mxu0 %v141
    %174 = vmatprep.subr.mxu0 %v144
    %175 = vmatpush1.msra.mxu0 %v143
    %176 = vmatprep.subr.mxu0 %v146
    %177 = vmatpush1.msra.mxu0 %v145
    %178 = vmatprep.subr.mxu0 %v148
    %179 = vmatpush1.msra.mxu0 %v147
    %180 = vmatprep.subr.mxu0 %v150
    %181 = vmatpush1.msra.mxu0 %v149
    %182 = vmatprep.subr.mxu0 0.0
    %183 = vmatpush1.msra.mxu0 0.0
    %184 = vmatprep.subr.mxu0 0.0
    %185 = vmatpush1.msra.mxu0 0.0
    %186 = vmatprep.subr.mxu0 0.0
    %187 = vmatpush1.msra.mxu0 0.0
    %188 = vmatprep.subr.mxu0 0.0
    %189 = vmatpush1.msra.mxu0 0.0
    %190 = vmatprep.subr.mxu0 0.0
    %191 = vmatpush1.msra.mxu0 0.0
    %192 = vmatprep.subr.mxu0 0.0
    %193 = vmatpush1.msra.mxu0 0.0
    %194 = vmatprep.subr.mxu0 0.0
    %195 = vmatpush1.msra.mxu0 0.0
    %196 = vmatprep.subr.mxu0 0.0
    %197 = vmatpush1.msra.mxu0 0.0
    %198 = vmatprep.subr.mxu0 0.0
    %199 = vmatpush1.msra.mxu0 0.0
    %200 = vmatprep.subr.mxu0 0.0
    %201 = vmatpush1.msra.mxu0 0.0
    %202 = vmatprep.subr.mxu0 0.0
    %203 = vmatpush1.msra.mxu0 0.0
    %204 = vmatprep.subr.mxu0 0.0
    %205 = vmatpush1.msra.mxu0 0.0
    %206 = vmatprep.subr.mxu0 0.0
    %207 = vmatpush1.msra.mxu0 0.0
    %208 = vmatprep.subr.mxu0 0.0
    %209 = vmatpush1.msra.mxu0 0.0
    %210 = vmatprep.subr.mxu0 0.0
    %211 = vmatpush1.msra.mxu0 0.0
    %212 = vmatprep.subr.mxu0 0.0
    %213 = vmatpush1.msra.mxu0 0.0
    %214 = vmatprep.subr.mxu0 0.0
    %215 = vmatpush1.msra.mxu0 0.0
    %216 = vmatprep.subr.mxu0 0.0
    %217 = vmatpush1.msra.mxu0 0.0
    %218 = vmatprep.subr.mxu0 0.0
    %219 = vmatpush1.msra.mxu0 0.0
    %220 = vmatprep.subr.mxu0 0.0
    %221 = vmatpush1.msra.mxu0 0.0
    %222 = vmatprep.mubr.f32.mxu0 0.0
    %223 = vmatmul.mubr.f32.gmra.mrb[0].mxu0 %v156
    %v224 = vpop.f32.mrb[0].mxu0
    %v225 = vadd.f32 %v152, %v224
    %v226 = vpop.f32.mrb[0].mxu0
    %v227 = vadd.f32 %v153, %v226
    %228 = vdwg.mxu0
    %vm229 = vcmask 1040384
    %v230 = vsel %vm229, %v225, -inf
    %v231 = vsel %vm229, %v227, -inf
    %v232 = vmax.f32 %v230, %v231
    %233 = vmax.xlane.f32.xlu0 %v232
    %v234 = vpop.xlane.xlu0 %233
    %v235 = vsub.f32 %v225, %v234
    %v236 = vsub.f32 %v227, %v234
    %v237 = vmul.f32 %v235, 1.442695
    %v238 = vpow.pop %v237
    %v239 = vmul.f32 %v236, 1.442695
    %v240 = vpow.pop %v239
    %v241 = vld [vmem:[%s1] sm:$0x3]
    %v243 = vlaneseq
    %v244 = vshrl.u32 %v243, 7
    %v245 = vsub.s32 0, %v244
    %v246 = vrot.slane %v241, %v245
    %v247 = vlaneseq
    %v248 = vshrl.u32 %v247, 7
    %v249 = vsub.s32 1, %v248
    %v250 = vrot.slane %v241, %v249
    %v253 = vmul.f32 %v238, %v246
    %v254 = vmul.f32 %v240, %v250
    %v255 = vld [vmem:[%s4] sm:$0xf]
    %v256 = vld [vmem:[%s4 + $0x4] sm:$0xf]
    %v257 = vld [vmem:[%s4 + $0x8] sm:$0xf]
    %v258 = vld [vmem:[%s4 + $0xc] sm:$0xf]
    %v259 = vld [vmem:[%s4 + $0x10] sm:$0xf]
    %v260 = vld [vmem:[%s4 + $0x14] sm:$0xf]
    %v261 = vld [vmem:[%s4 + $0x18] sm:$0xf]
    %v262 = vld [vmem:[%s4 + $0x1c] sm:$0xf]
    %v263 = vld [vmem:[%s4 + $0x20] sm:$0xf]
    %v264 = vld [vmem:[%s4 + $0x24] sm:$0xf]
    %v265 = vld [vmem:[%s4 + $0x28] sm:$0xf]
    %v266 = vld [vmem:[%s4 + $0x2c] sm:$0xf]
    %v267 = vld [vmem:[%s4 + $0x30] sm:$0xf]
    %v268 = vld [vmem:[%s4 + $0x34] sm:$0xf]
    %v269 = vld [vmem:[%s4 + $0x38] sm:$0xf]
    %v270 = vld [vmem:[%s4 + $0x3c] sm:$0xf]
    %v271 = vld [vmem:[%s4 + $0x40] sm:$0xf]
    %v272 = vld [vmem:[%s4 + $0x44] sm:$0xf]
    %v273 = vld [vmem:[%s4 + $0x48] sm:$0xf]
    %v274 = vld [vmem:[%s4 + $0x4c] sm:$0xf]
    %v275 = vld [vmem:[%s4 + $0x50] sm:$0xf]
    %v276 = vld [vmem:[%s4 + $0x54] sm:$0xf]
    %v277 = vld [vmem:[%s4 + $0x58] sm:$0xf]
    %v278 = vld [vmem:[%s4 + $0x5c] sm:$0xf]
    %v279 = vld [vmem:[%s4 + $0x60] sm:$0xf]
    %v280 = vld [vmem:[%s4 + $0x64] sm:$0xf]
    %v281 = vld [vmem:[%s4 + $0x68] sm:$0xf]
    %v282 = vld [vmem:[%s4 + $0x6c] sm:$0xf]
    %v283 = vld [vmem:[%s4 + $0x70] sm:$0xf]
    %v284 = vld [vmem:[%s4 + $0x74] sm:$0xf]
    %v285 = vld [vmem:[%s4 + $0x78] sm:$0xf]
    %v286 = vld [vmem:[%s4 + $0x7c] sm:$0xf]
    %v287 = vunpack.c.l.bf16 %v255
    %v288 = vunpack.c.l.bf16 %v256
    %v289 = vunpack.c.l.bf16 %v257
    %v290 = vunpack.c.l.bf16 %v258
    %v291 = vunpack.c.l.bf16 %v259
    %v292 = vunpack.c.l.bf16 %v260
    %v293 = vunpack.c.l.bf16 %v261
    %v294 = vunpack.c.l.bf16 %v262
    %v295 = vunpack.c.l.bf16 %v263
    %v296 = vunpack.c.l.bf16 %v264
    %v297 = vunpack.c.l.bf16 %v265
    %v298 = vunpack.c.l.bf16 %v266
    %v299 = vunpack.c.l.bf16 %v267
    %v300 = vunpack.c.l.bf16 %v268
    %v301 = vunpack.c.l.bf16 %v269
    %v302 = vunpack.c.l.bf16 %v270
    %v303 = vunpack.c.l.bf16 %v271
    %v304 = vunpack.c.l.bf16 %v272
    %v305 = vunpack.c.l.bf16 %v273
    %v306 = vunpack.c.l.bf16 %v274
    %v307 = vunpack.c.l.bf16 %v275
    %v308 = vunpack.c.l.bf16 %v276
    %v309 = vunpack.c.l.bf16 %v277
    %v310 = vunpack.c.l.bf16 %v278
    %v311 = vunpack.c.l.bf16 %v279
    %v312 = vunpack.c.l.bf16 %v280
    %v313 = vunpack.c.l.bf16 %v281
    %v314 = vunpack.c.l.bf16 %v282
    %v315 = vunpack.c.l.bf16 %v283
    %v316 = vunpack.c.l.bf16 %v284
    %v317 = vunpack.c.l.bf16 %v285
    %v318 = vunpack.c.l.bf16 %v286
    %319 = vmatprep.subr.mxu0 0.0
    %320 = vmatpush1.msra.mxu0 %v287
    %321 = vmatprep.subr.mxu0 0.0
    %322 = vmatpush1.msra.mxu0 %v288
    %323 = vmatprep.subr.mxu0 0.0
    %324 = vmatpush1.msra.mxu0 %v289
    %325 = vmatprep.subr.mxu0 0.0
    %326 = vmatpush1.msra.mxu0 %v290
    %327 = vmatprep.subr.mxu0 0.0
    %328 = vmatpush1.msra.mxu0 %v291
    %329 = vmatprep.subr.mxu0 0.0
    %330 = vmatpush1.msra.mxu0 %v292
    %331 = vmatprep.subr.mxu0 0.0
    %332 = vmatpush1.msra.mxu0 %v293
    %333 = vmatprep.subr.mxu0 0.0
    %334 = vmatpush1.msra.mxu0 %v294
    %335 = vmatprep.subr.mxu0 0.0
    %336 = vmatpush1.msra.mxu0 %v295
    %337 = vmatprep.subr.mxu0 0.0
    %338 = vmatpush1.msra.mxu0 %v296
    %339 = vmatprep.subr.mxu0 0.0
    %340 = vmatpush1.msra.mxu0 %v297
    %341 = vmatprep.subr.mxu0 0.0
    %342 = vmatpush1.msra.mxu0 %v298
    %343 = vmatprep.subr.mxu0 0.0
    %344 = vmatpush1.msra.mxu0 %v299
    %345 = vmatprep.subr.mxu0 0.0
    %346 = vmatpush1.msra.mxu0 %v300
    %347 = vmatprep.subr.mxu0 0.0
    %348 = vmatpush1.msra.mxu0 %v301
    %349 = vmatprep.subr.mxu0 0.0
    %350 = vmatpush1.msra.mxu0 %v302
    %351 = vmatprep.subr.mxu0 0.0
    %352 = vmatpush1.msra.mxu0 %v303
    %353 = vmatprep.subr.mxu0 0.0
    %354 = vmatpush1.msra.mxu0 %v304
    %355 = vmatprep.subr.mxu0 0.0
    %356 = vmatpush1.msra.mxu0 %v305
    %357 = vmatprep.subr.mxu0 0.0
    %358 = vmatpush1.msra.mxu0 %v306
    %359 = vmatprep.subr.mxu0 0.0
    %360 = vmatpush1.msra.mxu0 %v307
    %361 = vmatprep.subr.mxu0 0.0
    %362 = vmatpush1.msra.mxu0 %v308
    %363 = vmatprep.subr.mxu0 0.0
    %364 = vmatpush1.msra.mxu0 %v309
    %365 = vmatprep.subr.mxu0 0.0
    %366 = vmatpush1.msra.mxu0 %v310
    %367 = vmatprep.subr.mxu0 0.0
    %368 = vmatpush1.msra.mxu0 %v311
    %369 = vmatprep.subr.mxu0 0.0
    %370 = vmatpush1.msra.mxu0 %v312
    %371 = vmatprep.subr.mxu0 0.0
    %372 = vmatpush1.msra.mxu0 %v313
    %373 = vmatprep.subr.mxu0 0.0
    %374 = vmatpush1.msra.mxu0 %v314
    %375 = vmatprep.subr.mxu0 0.0
    %376 = vmatpush1.msra.mxu0 %v315
    %377 = vmatprep.subr.mxu0 0.0
    %378 = vmatpush1.msra.mxu0 %v316
    %379 = vmatprep.subr.mxu0 0.0
    %380 = vmatpush1.msra.mxu0 %v317
    %381 = vmatprep.subr.mxu0 0.0
    %382 = vmatpush1.msra.mxu0 %v318
    %383 = vmatprep.mubr.f32.mxu0 %v254
    %384 = vmatmul.mubr.f32.gmra.mrb[0].mxu0 %v253
    %v385 = vpop.f32.mrb[0].mxu0
    %v386 = vadd.f32 0.0, %v385
    %v387 = vpop.f32.mrb[0].mxu0
    %388 = vdwg.mxu0
    %v389 = vmul.f32 %v386, %v21
    %vm390 = vcmask 516096
    %v391 = vsel %vm390, %v389, 0.0
    %392 = vadd.xlane.f32.xlu0 %v391
    %v393 = vpop.xlane.xlu0 %392
    %v394 = vmul.f32 %v386, %v386
    %v395 = vsel %vm390, %v394, 0.0
    %396 = vadd.xlane.f32.xlu0 %v395
    %v397 = vpop.xlane.xlu0 %396
    %v398 = vmul.f32 %v21, %v21
    %v399 = vsel %vm390, %v398, 0.0
    %400 = vadd.xlane.f32.xlu0 %v399
    %v401 = vpop.xlane.xlu0 %400
    %v402 = vmul.f32 %v397, %v401
    %v403 = vmax.f32 %v402, 1e-16
    %v404 = vrsqrt.pop %v403
    %v405 = vmul.f32 %v393, %v404
    %v406 = vsub.f32 0.0, %v405
    %vm407 = vcmask 0
    %408 = vst.msk [vmem:[#allocation2] sm:$0x1] %vm407, %v406
    // Predicated region
    $region22: #{explain_drug_forward.1} parent=1 // pred_check
      _
    $region23: #{explain_drug_forward.1} parent=1 // pred_check_branch
      %410 = sbr.rel (0) target = $region25
    $region24: #{explain_drug_forward.1} parent=1 // pred_region
      %s412 = ssub.s32 16, 16
      %413 = vsyncadd [#allocation3], %s412
      %s415 = sshll.u32 [#allocation2], 4
      %s416 = int_to_ptr.vmem [resolvable:$true] %s415
      %418 = dma.vmem_to_hbm [thread:$0]  %s416, 16, %s5, [#allocation3]
    $region25: #{explain_drug_forward.1} parent=1 // pred_fallthru
      _
    // Predicated region
    $region26: #{explain_drug_forward.1} parent=1 // pred_check
      _
    $region27: #{explain_drug_forward.1} parent=1 // pred_check_branch
      %420 = sbr.rel (0) target = $region29
    $region28: #{explain_drug_forward.1} parent=1 // pred_region
      %421 = dma.done [#allocation3], 16
    $region29: #{explain_drug_forward.1} parent=1 // pred_fallthru
      _
    %422 = vsyncpa [#allocation3], 1

</llo_original>
